<compile_context>
chip_gen: v5e
topology: v5e:2x2
jax: 0.10.0
libtpu: 0.0.40
codegen_flags: <defaults>
</compile_context>

<pallas_src>
import functools

import jax
import jax.numpy as jnp
from jax.experimental import pallas as pl
from jax.experimental.pallas import tpu as pltpu

HIDDEN = 32  # nn.LSTM(hidden_size=32)


# ----------------------------------------------------------------------------
# Fused kernel: LSTM recurrence + Flatten + Linear(100) + ReLU + Dropout(eval) + Linear(1)
# ----------------------------------------------------------------------------
def _fused_rnn_kernel(x_ref, wih_bd_ref, whh_ref, b_ref, w1_ref, b1_ref, w2_ref, b2_ref,
                      out_ref, xg_ref, hs_ref, *, seq_len):
    # x_ref:      (BB, T*F)    batch-first input, (t, f) flattened along lanes
    # wih_bd_ref: (T*F, T*4H)  block-diagonal transposed weight_ih (gate order i,f,g,o)
    # whh_ref:    (H, 4H)      transposed weight_hh
    # b_ref:      (1, T*4H)    (bias_ih + bias_hh) tiled T times
    # w1_ref:     (T*H, N1)    transposed + zero-padded FC1 weight (N1 = 128-padded)
    # b1_ref:     (1, N1)      zero-padded FC1 bias
    # w2_ref:     (1, N1)      zero-padded FC2 weight row
    # b2_ref:     (1, 1)       FC2 bias
    # out_ref:    (BB, 1)
    # xg_ref:     (BB, T*4H)   VMEM scratch -- hoisted input projections
    # hs_ref:     (BB, T*H)    VMEM scratch -- per-step hidden states (flattened)
    H = HIDDEN
    H4 = 4 * H
    T = seq_len
    BB = x_ref.shape[0]

    # --- ONE input-projection matmul (K = T*F, N = T*4H), bias added once; lands in
    # --- VMEM scratch so nothing time-indexed stays live in vregs across the loop.
    xg_ref[...] = (
        jnp.dot(x_ref[...], wih_bd_ref[...], preferred_element_type=jnp.float32)
        + b_ref[...]
    )

    whh = whh_ref[...]                                   # (H, 4H), kept resident

    # --- Recurrence, fully unrolled (T static); only h and c are carried in vregs.
    h = jnp.zeros((BB, H), jnp.float32)
    c = jnp.zeros((BB, H), jnp.float32)

    for t in range(T):
        gates = xg_ref[:, t * H4:(t + 1) * H4]           # aligned 128-lane slice
        if t > 0:
            gates = gates + jnp.dot(h, whh, preferred_element_type=jnp.float32)
        # Lane-dense activations: one sigmoid + one tanh over the full 128 lanes,
        # then extract the 32-lane gate groups (tanh only used for the g-gate lanes).
        sig = jax.nn.sigmoid(gates)
        th = jnp.tanh(gates)
        i_g = sig[:, 0 * H:1 * H]
        f_g = sig[:, 1 * H:2 * H]
        g_g = th[:, 2 * H:3 * H]
        o_g = sig[:, 3 * H:4 * H]
        if t == 0:
            c = i_g * g_g                                # c0 == 0: skip f * c
        else:
            c = f_g * c + i_g * g_g
        h = o_g * jnp.tanh(c)
        hs_ref[:, t * H:(t + 1) * H] = h                 # one store per step

    # --- Flatten + Linear(32*T -> 100) as a single K=T*H matmul, then ReLU.
    h1 = jnp.maximum(
        jnp.dot(hs_ref[...], w1_ref[...], preferred_element_type=jnp.float32)
        + b1_ref[...],
        0.0,
    )                                                    # padded cols stay 0
    # Dropout(p=0.3): identity in eval mode.
    # FC2 (100 -> 1) as a lane reduction instead of an N=1 MXU matmul.
    out_ref[...] = jnp.sum(h1 * w2_ref[...], axis=-1, keepdims=True) + b2_ref[...]


# ----------------------------------------------------------------------------
# Generation-aware batch blocking
# ----------------------------------------------------------------------------
def _tensorcores_per_chip():
    # v7x exposes 2 TensorCores per chip (sharded via "parallel" grid axes);
    # v5e / v6e have a single TensorCore, where splitting the batch only serializes.
    try:
        kind = (getattr(jax.devices()[0], "device_kind", "") or "").lower()
    except Exception:
        return 1
    return 2 if "7" in kind else 1


def _batch_blocking(batch, n_cores):
    """Return (block, num_blocks, padded_batch)."""
    BB_CAP = 256                                # vreg-pressure-safe per-block batch
    b8 = ((batch + 7) // 8) * 8                 # sublane alignment
    blocks = n_cores if (n_cores > 1 and b8 >= 16) else 1
    while -(-b8 // blocks) > BB_CAP:            # grow grid only if the cap forces it
        blocks += n_cores
    bb = ((-(-b8 // blocks) + 7) // 8) * 8      # 8-aligned block
    return bb, blocks, bb * blocks


def rnn_model_forward(x, params):
    """x: (B, T, F) batch_first float32 -> (B, 1)."""
    B, T, F = x.shape
    H = HIDDEN
    H4 = 4 * H
    N1 = params["w1_t"].shape[1]

    BB, blocks, B_pad = _batch_blocking(B, _tensorcores_per_chip())

    # Contiguous flatten (no transpose); zero-pad the batch to the block multiple.
    x2 = x.reshape(B, T * F)
    if B_pad != B:
        x2 = jnp.pad(x2, ((0, B_pad - B), (0, 0)))

    flops = (2 * B_pad * (T * F) * (T * H4)     # block-diag input projection
             + 2 * B_pad * T * H * H4           # recurrence matmuls
             + 2 * B_pad * (T * H) * N1         # FC1
             + 2 * B_pad * N1                   # FC2 reduction
             + 10 * B_pad * T * H)              # gate elementwise
    transcendentals = B_pad * T * (2 * H4 + H)  # full-width sigmoid+tanh + tanh(c)
    bytes_accessed = 4 * (B_pad * T * F + (T * F) * (T * H4) + H * H4 + T * H4
                          + T * H * N1 + 2 * N1 + 1 + B_pad)

    out = pl.pallas_call(
        functools.partial(_fused_rnn_kernel, seq_len=T),
        out_shape=jax.ShapeDtypeStruct((B_pad, 1), jnp.float32),
        grid_spec=pltpu.PrefetchScalarGridSpec(
            num_scalar_prefetch=0,
            grid=(blocks,),
            in_specs=[
                pl.BlockSpec((BB, T * F), lambda b: (b, 0)),       # x (batch-tiled)
                pl.BlockSpec((T * F, T * H4), lambda b: (0, 0)),   # block-diag W_ih^T
                pl.BlockSpec((H, H4), lambda b: (0, 0)),           # W_hh^T
                pl.BlockSpec((1, T * H4), lambda b: (0, 0)),       # tiled lstm bias
                pl.BlockSpec((T * H, N1), lambda b: (0, 0)),       # W1^T (padded)
                pl.BlockSpec((1, N1), lambda b: (0, 0)),           # b1 (padded)
                pl.BlockSpec((1, N1), lambda b: (0, 0)),           # w2 row (padded)
                pl.BlockSpec((1, 1), lambda b: (0, 0)),            # b2
            ],
            out_specs=pl.BlockSpec((BB, 1), lambda b: (b, 0)),
            scratch_shapes=[
                pltpu.VMEM((BB, T * H4), jnp.float32),             # xg scratch
                pltpu.VMEM((BB, T * H), jnp.float32),              # h_t scratch
            ],
        ),
        compiler_params=pltpu.CompilerParams(
            dimension_semantics=("parallel",),
        ),
        cost_estimate=pl.CostEstimate(
            flops=flops,
            transcendentals=transcendentals,
            bytes_accessed=bytes_accessed,
        ),
    )(x2, params["w_ih_bd"], params["w_hh_t"], params["b_lstm"],
      params["w1_t"], params["b1"], params["w2_row"], params["b2"])

    return out[:B] if B_pad != B else out


# ----------------------------------------------------------------------------
# Parameter preparation (PyTorch layout -> kernel layout; done once, outside the kernel)
# ----------------------------------------------------------------------------
def prepare_params(w_ih, w_hh, b_ih, b_hh, w1, b1, w2, b2):
    H = HIDDEN
    fc1_out, th_dim = w1.shape                   # (100, T*H)
    T = th_dim // H
    pad = (-fc1_out) % 128                       # lane-pad the FC head to 128
    wih_t = w_ih.T                               # (F, 4H)
    return {
        "w_ih_bd": jnp.kron(jnp.eye(T, dtype=wih_t.dtype), wih_t),  # (T*F, T*4H)
        "w_hh_t": w_hh.T,                                            # (H, 4H)
        "b_lstm": jnp.tile(b_ih + b_hh, T).reshape(1, -1),           # (1, T*4H)
        "w1_t": jnp.pad(w1.T, ((0, 0), (0, pad))),                   # (T*H, 128)
        "b1": jnp.pad(b1.reshape(1, -1), ((0, 0), (0, pad))),        # (1, 128)
        "w2_row": jnp.pad(w2.reshape(1, -1), ((0, 0), (0, pad))),    # (1, 128)
        "b2": b2.reshape(1, 1),                                      # (1, 1)
    }


# ----------------------------------------------------------------------------
# Pure-JAX reference (sanity check only; original PyTorch weight layout)
# ----------------------------------------------------------------------------
def reference_forward(x, w_ih, w_hh, b_ih, b_hh, w1, b1, w2, b2):
    B, T, _ = x.shape
    H = HIDDEN
    h = jnp.zeros((B, H), jnp.float32)
    c = jnp.zeros((B, H), jnp.float32)
    outs = []
    for t in range(T):
        g = x[:, t, :] @ w_ih.T + h @ w_hh.T + b_ih + b_hh
        i = jax.nn.sigmoid(g[:, 0 * H:1 * H])
        f = jax.nn.sigmoid(g[:, 1 * H:2 * H])
        gg = jnp.tanh(g[:, 2 * H:3 * H])
        o = jax.nn.sigmoid(g[:, 3 * H:4 * H])
        c = f * c + i * gg
        h = o * jnp.tanh(c)
        outs.append(h)
    hs = jnp.stack(outs, axis=1).reshape(B, -1)       # nn.Flatten on (B, T, H)
    h1 = jnp.maximum(hs @ w1.T + b1, 0.0)             # Linear + ReLU (+ eval dropout)
    return h1 @ w2.T + b2                             # Linear(100 -> 1)


if __name__ == "__main__":
    # Shapes consistent with the module: input_shape = (seq_len, n_features)
    B, T, F = 2, 8, 4
    H = HIDDEN

    key = jax.random.PRNGKey(0)
    ks = jax.random.split(key, 9)
    s = 1.0 / jnp.sqrt(jnp.float32(H))

    # PyTorch LSTM params: weight_ih (4H, F), weight_hh (4H, H), biases (4H,) each.
    w_ih = jax.random.uniform(ks[0], (4 * H, F), jnp.float32, -s, s)
    w_hh = jax.random.uniform(ks[1], (4 * H, H), jnp.float32, -s, s)
    b_ih = jax.random.uniform(ks[2], (4 * H,), jnp.float32, -s, s)
    b_hh = jax.random.uniform(ks[3], (4 * H,), jnp.float32, -s, s)
    # Head: Linear(32*T, 100), Linear(100, 1)
    w1 = jax.random.uniform(ks[4], (100, H * T), jnp.float32, -0.05, 0.05)
    b1 = jax.random.uniform(ks[5], (100,), jnp.float32, -0.05, 0.05)
    w2 = jax.random.uniform(ks[6], (1, 100), jnp.float32, -0.1, 0.1)
    b2 = jax.random.uniform(ks[7], (1,), jnp.float32, -0.1, 0.1)

    params = prepare_params(w_ih, w_hh, b_ih, b_hh, w1, b1, w2, b2)

    x = jax.random.normal(ks[8], (B, T, F), jnp.float32)

    out = jax.block_until_ready(rnn_model_forward(x, params))
    assert out.shape == (B, 1), out.shape

    ref = jax.block_until_ready(reference_forward(x, w_ih, w_hh, b_ih, b_hh, w1, b1, w2, b2))
    assert jnp.allclose(out, ref, rtol=1e-4, atol=1e-4), (out, ref)

    print("KERNEL_OK")
</pallas_src>

<mosaic_0001>
module attributes {stable_mosaic.version = 11 : i64} {
  func.func @_fused_rnn_kernel(%arg0: i32, %arg1: memref<8x32xf32, #tpu.memory_space<vmem>>, %arg2: memref<32x1024xf32, #tpu.memory_space<vmem>>, %arg3: memref<32x128xf32, #tpu.memory_space<vmem>>, %arg4: memref<1x1024xf32, #tpu.memory_space<vmem>>, %arg5: memref<256x128xf32, #tpu.memory_space<vmem>>, %arg6: memref<1x128xf32, #tpu.memory_space<vmem>>, %arg7: memref<1x128xf32, #tpu.memory_space<vmem>>, %arg8: memref<1x1xf32, #tpu.memory_space<vmem>>, %arg9: memref<8x1xf32, #tpu.memory_space<vmem>>, %arg10: memref<8x1024xf32, #tpu.memory_space<vmem>>, %arg11: memref<8x256xf32, #tpu.memory_space<vmem>>) attributes {dimension_semantics = [#tpu.dimension_semantics<parallel>], iteration_bounds = array<i64: 1>, scalar_prefetch = 0 : i64, scratch_operands = 2 : i64, tpu.core_type = #tpu.core_type<tc>, window_params = [{transform_indices = @transform_0, window_bounds = array<i64: 8, 32>}, {pipeline_mode = #tpu.pipeline_mode<synchronous>, transform_indices = @transform_1, window_bounds = array<i64: 32, 1024>}, {pipeline_mode = #tpu.pipeline_mode<synchronous>, transform_indices = @transform_2, window_bounds = array<i64: 32, 128>}, {pipeline_mode = #tpu.pipeline_mode<synchronous>, transform_indices = @transform_3, window_bounds = array<i64: 1, 1024>}, {pipeline_mode = #tpu.pipeline_mode<synchronous>, transform_indices = @transform_4, window_bounds = array<i64: 256, 128>}, {pipeline_mode = #tpu.pipeline_mode<synchronous>, transform_indices = @transform_5, window_bounds = array<i64: 1, 128>}, {pipeline_mode = #tpu.pipeline_mode<synchronous>, transform_indices = @transform_6, window_bounds = array<i64: 1, 128>}, {pipeline_mode = #tpu.pipeline_mode<synchronous>, transform_indices = @transform_7, window_bounds = array<i64: 1, 1>}, {transform_indices = @transform_8, window_bounds = array<i64: 8, 1>}]} {
    %c0 = arith.constant 0 : index
    %c0_0 = arith.constant 0 : index
    %0 = vector.load %arg1[%c0, %c0_0] : memref<8x32xf32, #tpu.memory_space<vmem>>, vector<8x32xf32>
    %c0_1 = arith.constant 0 : index
    %c0_2 = arith.constant 0 : index
    %1 = vector.load %arg2[%c0_1, %c0_2] : memref<32x1024xf32, #tpu.memory_space<vmem>>, vector<32x1024xf32>
    %cst = arith.constant dense<0.000000e+00> : vector<8x1024xf32>
    %2 = tpu.matmul %0, %1, %cst {dimension_numbers = #tpu.dot_dimension_numbers<[1], [0], [0], [1], [0, 0, 1, 1], [], []>} : vector<8x32xf32>, vector<32x1024xf32>, vector<8x1024xf32> -> vector<8x1024xf32>
    %c0_3 = arith.constant 0 : index
    %c0_4 = arith.constant 0 : index
    %3 = vector.load %arg4[%c0_3, %c0_4] : memref<1x1024xf32, #tpu.memory_space<vmem>>, vector<1x1024xf32>
    %4 = vector.broadcast %3 : vector<1x1024xf32> to vector<8x1024xf32>
    %5 = arith.addf %2, %4 : vector<8x1024xf32>
    %c0_5 = arith.constant 0 : index
    %c0_6 = arith.constant 0 : index
    %6 = vector.load %arg10[%c0_5, %c0_6] : memref<8x1024xf32, #tpu.memory_space<vmem>>, vector<8x1024xf32>
    tpu.vector_store %arg10[%c0_5, %c0_6], %5 {strides = array<i32>} : memref<8x1024xf32, #tpu.memory_space<vmem>>, vector<8x1024xf32>,
    %c0_7 = arith.constant 0 : index
    %c0_8 = arith.constant 0 : index
    %7 = vector.load %arg3[%c0_7, %c0_8] : memref<32x128xf32, #tpu.memory_space<vmem>>, vector<32x128xf32>
    %c0_9 = arith.constant 0 : index
    %c0_10 = arith.constant 0 : index
    %8 = vector.load %arg10[%c0_9, %c0_10] : memref<8x1024xf32, #tpu.memory_space<vmem>>, vector<8x128xf32>
    %9 = arith.negf %8 : vector<8x128xf32>
    %10 = math.exp %9 : vector<8x128xf32>
    %cst_11 = arith.constant 1.000000e+00 : f32
    %11 = vector.broadcast %cst_11 : f32 to vector<8x128xf32>
    %12 = arith.addf %11, %10 : vector<8x128xf32>
    %13 = arith.divf %11, %12 : vector<8x128xf32>
    %14 = math.tanh %8 : vector<8x128xf32>
    %15 = vector.extract_strided_slice %13 {offsets = [0, 0], sizes = [8, 32], strides = [1, 1]} : vector<8x128xf32> to vector<8x32xf32>
    %16 = vector.extract_strided_slice %14 {offsets = [0, 64], sizes = [8, 32], strides = [1, 1]} : vector<8x128xf32> to vector<8x32xf32>
    %17 = vector.extract_strided_slice %13 {offsets = [0, 96], sizes = [8, 32], strides = [1, 1]} : vector<8x128xf32> to vector<8x32xf32>
    %18 = arith.mulf %15, %16 : vector<8x32xf32>
    %19 = math.tanh %18 : vector<8x32xf32>
    %20 = arith.mulf %17, %19 : vector<8x32xf32>
    %c0_12 = arith.constant 0 : index
    %c0_13 = arith.constant 0 : index
    %21 = vector.load %arg11[%c0_12, %c0_13] : memref<8x256xf32, #tpu.memory_space<vmem>>, vector<8x32xf32>
    tpu.vector_store %arg11[%c0_12, %c0_13], %20 {strides = array<i32>} : memref<8x256xf32, #tpu.memory_space<vmem>>, vector<8x32xf32>,
    %c0_14 = arith.constant 0 : index
    %c128 = arith.constant 128 : index
    %22 = vector.load %arg10[%c0_14, %c128] : memref<8x1024xf32, #tpu.memory_space<vmem>>, vector<8x128xf32>
    %cst_15 = arith.constant dense<0.000000e+00> : vector<8x128xf32>
    %23 = tpu.matmul %20, %7, %cst_15 {dimension_numbers = #tpu.dot_dimension_numbers<[1], [0], [0], [1], [0, 0, 1, 1], [], []>} : vector<8x32xf32>, vector<32x128xf32>, vector<8x128xf32> -> vector<8x128xf32>
    %24 = arith.addf %22, %23 : vector<8x128xf32>
    %25 = arith.negf %24 : vector<8x128xf32>
    %26 = math.exp %25 : vector<8x128xf32>
    %cst_16 = arith.constant 1.000000e+00 : f32
    %27 = vector.broadcast %cst_16 : f32 to vector<8x128xf32>
    %28 = arith.addf %27, %26 : vector<8x128xf32>
    %29 = arith.divf %27, %28 : vector<8x128xf32>
    %30 = math.tanh %24 : vector<8x128xf32>
    %31 = vector.extract_strided_slice %29 {offsets = [0, 0], sizes = [8, 32], strides = [1, 1]} : vector<8x128xf32> to vector<8x32xf32>
    %32 = vector.extract_strided_slice %29 {offsets = [0, 32], sizes = [8, 32], strides = [1, 1]} : vector<8x128xf32> to vector<8x32xf32>
    %33 = vector.extract_strided_slice %30 {offsets = [0, 64], sizes = [8, 32], strides = [1, 1]} : vector<8x128xf32> to vector<8x32xf32>
    %34 = vector.extract_strided_slice %29 {offsets = [0, 96], sizes = [8, 32], strides = [1, 1]} : vector<8x128xf32> to vector<8x32xf32>
    %35 = arith.mulf %32, %18 : vector<8x32xf32>
    %36 = arith.mulf %31, %33 : vector<8x32xf32>
    %37 = arith.addf %35, %36 : vector<8x32xf32>
    %38 = math.tanh %37 : vector<8x32xf32>
    %39 = arith.mulf %34, %38 : vector<8x32xf32>
    %c0_17 = arith.constant 0 : index
    %c32 = arith.constant 32 : index
    %40 = vector.load %arg11[%c0_17, %c32] : memref<8x256xf32, #tpu.memory_space<vmem>>, vector<8x32xf32>
    tpu.vector_store %arg11[%c0_17, %c32], %39 {strides = array<i32>} : memref<8x256xf32, #tpu.memory_space<vmem>>, vector<8x32xf32>,
    %c0_18 = arith.constant 0 : index
    %c256 = arith.constant 256 : index
    %41 = vector.load %arg10[%c0_18, %c256] : memref<8x1024xf32, #tpu.memory_space<vmem>>, vector<8x128xf32>
    %cst_19 = arith.constant dense<0.000000e+00> : vector<8x128xf32>
    %42 = tpu.matmul %39, %7, %cst_19 {dimension_numbers = #tpu.dot_dimension_numbers<[1], [0], [0], [1], [0, 0, 1, 1], [], []>} : vector<8x32xf32>, vector<32x128xf32>, vector<8x128xf32> -> vector<8x128xf32>
    %43 = arith.addf %41, %42 : vector<8x128xf32>
    %44 = arith.negf %43 : vector<8x128xf32>
    %45 = math.exp %44 : vector<8x128xf32>
    %cst_20 = arith.constant 1.000000e+00 : f32
    %46 = vector.broadcast %cst_20 : f32 to vector<8x128xf32>
    %47 = arith.addf %46, %45 : vector<8x128xf32>
    %48 = arith.divf %46, %47 : vector<8x128xf32>
    %49 = math.tanh %43 : vector<8x128xf32>
    %50 = vector.extract_strided_slice %48 {offsets = [0, 0], sizes = [8, 32], strides = [1, 1]} : vector<8x128xf32> to vector<8x32xf32>
    %51 = vector.extract_strided_slice %48 {offsets = [0, 32], sizes = [8, 32], strides = [1, 1]} : vector<8x128xf32> to vector<8x32xf32>
    %52 = vector.extract_strided_slice %49 {offsets = [0, 64], sizes = [8, 32], strides = [1, 1]} : vector<8x128xf32> to vector<8x32xf32>
    %53 = vector.extract_strided_slice %48 {offsets = [0, 96], sizes = [8, 32], strides = [1, 1]} : vector<8x128xf32> to vector<8x32xf32>
    %54 = arith.mulf %51, %37 : vector<8x32xf32>
    %55 = arith.mulf %50, %52 : vector<8x32xf32>
    %56 = arith.addf %54, %55 : vector<8x32xf32>
    %57 = math.tanh %56 : vector<8x32xf32>
    %58 = arith.mulf %53, %57 : vector<8x32xf32>
    %c0_21 = arith.constant 0 : index
    %c64 = arith.constant 64 : index
    %59 = vector.load %arg11[%c0_21, %c64] : memref<8x256xf32, #tpu.memory_space<vmem>>, vector<8x32xf32>
    tpu.vector_store %arg11[%c0_21, %c64], %58 {strides = array<i32>} : memref<8x256xf32, #tpu.memory_space<vmem>>, vector<8x32xf32>,
    %c0_22 = arith.constant 0 : index
    %c384 = arith.constant 384 : index
    %60 = vector.load %arg10[%c0_22, %c384] : memref<8x1024xf32, #tpu.memory_space<vmem>>, vector<8x128xf32>
    %cst_23 = arith.constant dense<0.000000e+00> : vector<8x128xf32>
    %61 = tpu.matmul %58, %7, %cst_23 {dimension_numbers = #tpu.dot_dimension_numbers<[1], [0], [0], [1], [0, 0, 1, 1], [], []>} : vector<8x32xf32>, vector<32x128xf32>, vector<8x128xf32> -> vector<8x128xf32>
    %62 = arith.addf %60, %61 : vector<8x128xf32>
    %63 = arith.negf %62 : vector<8x128xf32>
    %64 = math.exp %63 : vector<8x128xf32>
    %cst_24 = arith.constant 1.000000e+00 : f32
    %65 = vector.broadcast %cst_24 : f32 to vector<8x128xf32>
    %66 = arith.addf %65, %64 : vector<8x128xf32>
    %67 = arith.divf %65, %66 : vector<8x128xf32>
    %68 = math.tanh %62 : vector<8x128xf32>
    %69 = vector.extract_strided_slice %67 {offsets = [0, 0], sizes = [8, 32], strides = [1, 1]} : vector<8x128xf32> to vector<8x32xf32>
    %70 = vector.extract_strided_slice %67 {offsets = [0, 32], sizes = [8, 32], strides = [1, 1]} : vector<8x128xf32> to vector<8x32xf32>
    %71 = vector.extract_strided_slice %68 {offsets = [0, 64], sizes = [8, 32], strides = [1, 1]} : vector<8x128xf32> to vector<8x32xf32>
    %72 = vector.extract_strided_slice %67 {offsets = [0, 96], sizes = [8, 32], strides = [1, 1]} : vector<8x128xf32> to vector<8x32xf32>
    %73 = arith.mulf %70, %56 : vector<8x32xf32>
    %74 = arith.mulf %69, %71 : vector<8x32xf32>
    %75 = arith.addf %73, %74 : vector<8x32xf32>
    %76 = math.tanh %75 : vector<8x32xf32>
    %77 = arith.mulf %72, %76 : vector<8x32xf32>
    %c0_25 = arith.constant 0 : index
    %c96 = arith.constant 96 : index
    %78 = vector.load %arg11[%c0_25, %c96] : memref<8x256xf32, #tpu.memory_space<vmem>>, vector<8x32xf32>
    tpu.vector_store %arg11[%c0_25, %c96], %77 {strides = array<i32>} : memref<8x256xf32, #tpu.memory_space<vmem>>, vector<8x32xf32>,
    %c0_26 = arith.constant 0 : index
    %c512 = arith.constant 512 : index
    %79 = vector.load %arg10[%c0_26, %c512] : memref<8x1024xf32, #tpu.memory_space<vmem>>, vector<8x128xf32>
    %cst_27 = arith.constant dense<0.000000e+00> : vector<8x128xf32>
    %80 = tpu.matmul %77, %7, %cst_27 {dimension_numbers = #tpu.dot_dimension_numbers<[1], [0], [0], [1], [0, 0, 1, 1], [], []>} : vector<8x32xf32>, vector<32x128xf32>, vector<8x128xf32> -> vector<8x128xf32>
    %81 = arith.addf %79, %80 : vector<8x128xf32>
    %82 = arith.negf %81 : vector<8x128xf32>
    %83 = math.exp %82 : vector<8x128xf32>
    %cst_28 = arith.constant 1.000000e+00 : f32
    %84 = vector.broadcast %cst_28 : f32 to vector<8x128xf32>
    %85 = arith.addf %84, %83 : vector<8x128xf32>
    %86 = arith.divf %84, %85 : vector<8x128xf32>
    %87 = math.tanh %81 : vector<8x128xf32>
    %88 = vector.extract_strided_slice %86 {offsets = [0, 0], sizes = [8, 32], strides = [1, 1]} : vector<8x128xf32> to vector<8x32xf32>
    %89 = vector.extract_strided_slice %86 {offsets = [0, 32], sizes = [8, 32], strides = [1, 1]} : vector<8x128xf32> to vector<8x32xf32>
    %90 = vector.extract_strided_slice %87 {offsets = [0, 64], sizes = [8, 32], strides = [1, 1]} : vector<8x128xf32> to vector<8x32xf32>
    %91 = vector.extract_strided_slice %86 {offsets = [0, 96], sizes = [8, 32], strides = [1, 1]} : vector<8x128xf32> to vector<8x32xf32>
    %92 = arith.mulf %89, %75 : vector<8x32xf32>
    %93 = arith.mulf %88, %90 : vector<8x32xf32>
    %94 = arith.addf %92, %93 : vector<8x32xf32>
    %95 = math.tanh %94 : vector<8x32xf32>
    %96 = arith.mulf %91, %95 : vector<8x32xf32>
    %c0_29 = arith.constant 0 : index
    %c128_30 = arith.constant 128 : index
    %97 = vector.load %arg11[%c0_29, %c128_30] : memref<8x256xf32, #tpu.memory_space<vmem>>, vector<8x32xf32>
    tpu.vector_store %arg11[%c0_29, %c128_30], %96 {strides = array<i32>} : memref<8x256xf32, #tpu.memory_space<vmem>>, vector<8x32xf32>,
    %c0_31 = arith.constant 0 : index
    %c640 = arith.constant 640 : index
    %98 = vector.load %arg10[%c0_31, %c640] : memref<8x1024xf32, #tpu.memory_space<vmem>>, vector<8x128xf32>
    %cst_32 = arith.constant dense<0.000000e+00> : vector<8x128xf32>
    %99 = tpu.matmul %96, %7, %cst_32 {dimension_numbers = #tpu.dot_dimension_numbers<[1], [0], [0], [1], [0, 0, 1, 1], [], []>} : vector<8x32xf32>, vector<32x128xf32>, vector<8x128xf32> -> vector<8x128xf32>
    %100 = arith.addf %98, %99 : vector<8x128xf32>
    %101 = arith.negf %100 : vector<8x128xf32>
    %102 = math.exp %101 : vector<8x128xf32>
    %cst_33 = arith.constant 1.000000e+00 : f32
    %103 = vector.broadcast %cst_33 : f32 to vector<8x128xf32>
    %104 = arith.addf %103, %102 : vector<8x128xf32>
    %105 = arith.divf %103, %104 : vector<8x128xf32>
    %106 = math.tanh %100 : vector<8x128xf32>
    %107 = vector.extract_strided_slice %105 {offsets = [0, 0], sizes = [8, 32], strides = [1, 1]} : vector<8x128xf32> to vector<8x32xf32>
    %108 = vector.extract_strided_slice %105 {offsets = [0, 32], sizes = [8, 32], strides = [1, 1]} : vector<8x128xf32> to vector<8x32xf32>
    %109 = vector.extract_strided_slice %106 {offsets = [0, 64], sizes = [8, 32], strides = [1, 1]} : vector<8x128xf32> to vector<8x32xf32>
    %110 = vector.extract_strided_slice %105 {offsets = [0, 96], sizes = [8, 32], strides = [1, 1]} : vector<8x128xf32> to vector<8x32xf32>
    %111 = arith.mulf %108, %94 : vector<8x32xf32>
    %112 = arith.mulf %107, %109 : vector<8x32xf32>
    %113 = arith.addf %111, %112 : vector<8x32xf32>
    %114 = math.tanh %113 : vector<8x32xf32>
    %115 = arith.mulf %110, %114 : vector<8x32xf32>
    %c0_34 = arith.constant 0 : index
    %c160 = arith.constant 160 : index
    %116 = vector.load %arg11[%c0_34, %c160] : memref<8x256xf32, #tpu.memory_space<vmem>>, vector<8x32xf32>
    tpu.vector_store %arg11[%c0_34, %c160], %115 {strides = array<i32>} : memref<8x256xf32, #tpu.memory_space<vmem>>, vector<8x32xf32>,
    %c0_35 = arith.constant 0 : index
    %c768 = arith.constant 768 : index
    %117 = vector.load %arg10[%c0_35, %c768] : memref<8x1024xf32, #tpu.memory_space<vmem>>, vector<8x128xf32>
    %cst_36 = arith.constant dense<0.000000e+00> : vector<8x128xf32>
    %118 = tpu.matmul %115, %7, %cst_36 {dimension_numbers = #tpu.dot_dimension_numbers<[1], [0], [0], [1], [0, 0, 1, 1], [], []>} : vector<8x32xf32>, vector<32x128xf32>, vector<8x128xf32> -> vector<8x128xf32>
    %119 = arith.addf %117, %118 : vector<8x128xf32>
    %120 = arith.negf %119 : vector<8x128xf32>
    %121 = math.exp %120 : vector<8x128xf32>
    %cst_37 = arith.constant 1.000000e+00 : f32
    %122 = vector.broadcast %cst_37 : f32 to vector<8x128xf32>
    %123 = arith.addf %122, %121 : vector<8x128xf32>
    %124 = arith.divf %122, %123 : vector<8x128xf32>
    %125 = math.tanh %119 : vector<8x128xf32>
    %126 = vector.extract_strided_slice %124 {offsets = [0, 0], sizes = [8, 32], strides = [1, 1]} : vector<8x128xf32> to vector<8x32xf32>
    %127 = vector.extract_strided_slice %124 {offsets = [0, 32], sizes = [8, 32], strides = [1, 1]} : vector<8x128xf32> to vector<8x32xf32>
    %128 = vector.extract_strided_slice %125 {offsets = [0, 64], sizes = [8, 32], strides = [1, 1]} : vector<8x128xf32> to vector<8x32xf32>
    %129 = vector.extract_strided_slice %124 {offsets = [0, 96], sizes = [8, 32], strides = [1, 1]} : vector<8x128xf32> to vector<8x32xf32>
    %130 = arith.mulf %127, %113 : vector<8x32xf32>
    %131 = arith.mulf %126, %128 : vector<8x32xf32>
    %132 = arith.addf %130, %131 : vector<8x32xf32>
    %133 = math.tanh %132 : vector<8x32xf32>
    %134 = arith.mulf %129, %133 : vector<8x32xf32>
    %c0_38 = arith.constant 0 : index
    %c192 = arith.constant 192 : index
    %135 = vector.load %arg11[%c0_38, %c192] : memref<8x256xf32, #tpu.memory_space<vmem>>, vector<8x32xf32>
    tpu.vector_store %arg11[%c0_38, %c192], %134 {strides = array<i32>} : memref<8x256xf32, #tpu.memory_space<vmem>>, vector<8x32xf32>,
    %c0_39 = arith.constant 0 : index
    %c896 = arith.constant 896 : index
    %136 = vector.load %arg10[%c0_39, %c896] : memref<8x1024xf32, #tpu.memory_space<vmem>>, vector<8x128xf32>
    %cst_40 = arith.constant dense<0.000000e+00> : vector<8x128xf32>
    %137 = tpu.matmul %134, %7, %cst_40 {dimension_numbers = #tpu.dot_dimension_numbers<[1], [0], [0], [1], [0, 0, 1, 1], [], []>} : vector<8x32xf32>, vector<32x128xf32>, vector<8x128xf32> -> vector<8x128xf32>
    %138 = arith.addf %136, %137 : vector<8x128xf32>
    %139 = arith.negf %138 : vector<8x128xf32>
    %140 = math.exp %139 : vector<8x128xf32>
    %cst_41 = arith.constant 1.000000e+00 : f32
    %141 = vector.broadcast %cst_41 : f32 to vector<8x128xf32>
    %142 = arith.addf %141, %140 : vector<8x128xf32>
    %143 = arith.divf %141, %142 : vector<8x128xf32>
    %144 = math.tanh %138 : vector<8x128xf32>
    %145 = vector.extract_strided_slice %143 {offsets = [0, 0], sizes = [8, 32], strides = [1, 1]} : vector<8x128xf32> to vector<8x32xf32>
    %146 = vector.extract_strided_slice %143 {offsets = [0, 32], sizes = [8, 32], strides = [1, 1]} : vector<8x128xf32> to vector<8x32xf32>
    %147 = vector.extract_strided_slice %144 {offsets = [0, 64], sizes = [8, 32], strides = [1, 1]} : vector<8x128xf32> to vector<8x32xf32>
    %148 = vector.extract_strided_slice %143 {offsets = [0, 96], sizes = [8, 32], strides = [1, 1]} : vector<8x128xf32> to vector<8x32xf32>
    %149 = arith.mulf %146, %132 : vector<8x32xf32>
    %150 = arith.mulf %145, %147 : vector<8x32xf32>
    %151 = arith.addf %149, %150 : vector<8x32xf32>
    %152 = math.tanh %151 : vector<8x32xf32>
    %153 = arith.mulf %148, %152 : vector<8x32xf32>
    %c0_42 = arith.constant 0 : index
    %c224 = arith.constant 224 : index
    %154 = vector.load %arg11[%c0_42, %c224] : memref<8x256xf32, #tpu.memory_space<vmem>>, vector<8x32xf32>
    tpu.vector_store %arg11[%c0_42, %c224], %153 {strides = array<i32>} : memref<8x256xf32, #tpu.memory_space<vmem>>, vector<8x32xf32>,
    %c0_43 = arith.constant 0 : index
    %c0_44 = arith.constant 0 : index
    %155 = vector.load %arg11[%c0_43, %c0_44] : memref<8x256xf32, #tpu.memory_space<vmem>>, vector<8x256xf32>
    %c0_45 = arith.constant 0 : index
    %c0_46 = arith.constant 0 : index
    %156 = vector.load %arg5[%c0_45, %c0_46] : memref<256x128xf32, #tpu.memory_space<vmem>>, vector<256x128xf32>
    %cst_47 = arith.constant dense<0.000000e+00> : vector<8x128xf32>
    %157 = tpu.matmul %155, %156, %cst_47 {dimension_numbers = #tpu.dot_dimension_numbers<[1], [0], [0], [1], [0, 0, 1, 1], [], []>} : vector<8x256xf32>, vector<256x128xf32>, vector<8x128xf32> -> vector<8x128xf32>
    %c0_48 = arith.constant 0 : index
    %c0_49 = arith.constant 0 : index
    %158 = vector.load %arg6[%c0_48, %c0_49] : memref<1x128xf32, #tpu.memory_space<vmem>>, vector<1x128xf32>
    %159 = vector.broadcast %158 : vector<1x128xf32> to vector<8x128xf32>
    %160 = arith.addf %157, %159 : vector<8x128xf32>
    %cst_50 = arith.constant 0.000000e+00 : f32
    %161 = vector.broadcast %cst_50 : f32 to vector<8x128xf32>
    %162 = arith.maximumf %160, %161 : vector<8x128xf32>
    %c0_51 = arith.constant 0 : index
    %c0_52 = arith.constant 0 : index
    %163 = vector.load %arg7[%c0_51, %c0_52] : memref<1x128xf32, #tpu.memory_space<vmem>>, vector<1x128xf32>
    %164 = vector.broadcast %163 : vector<1x128xf32> to vector<8x128xf32>
    %165 = arith.mulf %162, %164 : vector<8x128xf32>
    %cst_53 = arith.constant dense<0.000000e+00> : vector<8xf32>
    %166 = vector.multi_reduction <add>, %165, %cst_53 [1] : vector<8x128xf32> to vector<8xf32>
    %167 = vector.shape_cast %166 : vector<8xf32> to vector<8x1xf32>
    %c0_54 = arith.constant 0 : index
    %c0_55 = arith.constant 0 : index
    %168 = vector.load %arg8[%c0_54, %c0_55] : memref<1x1xf32, #tpu.memory_space<vmem>>, vector<1x1xf32>
    %169 = vector.broadcast %168 : vector<1x1xf32> to vector<8x1xf32>
    %170 = arith.addf %167, %169 : vector<8x1xf32>
    %c0_56 = arith.constant 0 : index
    %c0_57 = arith.constant 0 : index
    %171 = vector.load %arg9[%c0_56, %c0_57] : memref<8x1xf32, #tpu.memory_space<vmem>>, vector<8x1xf32>
    tpu.vector_store %arg9[%c0_56, %c0_57], %170 {strides = array<i32>} : memref<8x1xf32, #tpu.memory_space<vmem>>, vector<8x1xf32>,
    return
  }
  func.func @transform_0(%arg0: i32) -> (i32, i32) {
    %c0_i32 = arith.constant 0 : i32
    %c0_i32_0 = arith.constant 0 : i32
    return %arg0, %c0_i32 : i32, i32
  }
  func.func @transform_1(%arg0: i32) -> (i32, i32) {
    %c0_i32 = arith.constant 0 : i32
    %c0_i32_0 = arith.constant 0 : i32
    %c0_i32_1 = arith.constant 0 : i32
    return %c0_i32, %c0_i32_0 : i32, i32
  }
  func.func @transform_2(%arg0: i32) -> (i32, i32) {
    %c0_i32 = arith.constant 0 : i32
    %c0_i32_0 = arith.constant 0 : i32
    %c0_i32_1 = arith.constant 0 : i32
    return %c0_i32, %c0_i32_0 : i32, i32
  }
  func.func @transform_3(%arg0: i32) -> (i32, i32) {
    %c0_i32 = arith.constant 0 : i32
    %c0_i32_0 = arith.constant 0 : i32
    %c0_i32_1 = arith.constant 0 : i32
    return %c0_i32, %c0_i32_0 : i32, i32
  }
  func.func @transform_4(%arg0: i32) -> (i32, i32) {
    %c0_i32 = arith.constant 0 : i32
    %c0_i32_0 = arith.constant 0 : i32
    %c0_i32_1 = arith.constant 0 : i32
    return %c0_i32, %c0_i32_0 : i32, i32
  }
  func.func @transform_5(%arg0: i32) -> (i32, i32) {
    %c0_i32 = arith.constant 0 : i32
    %c0_i32_0 = arith.constant 0 : i32
    %c0_i32_1 = arith.constant 0 : i32
    return %c0_i32, %c0_i32_0 : i32, i32
  }
  func.func @transform_6(%arg0: i32) -> (i32, i32) {
    %c0_i32 = arith.constant 0 : i32
    %c0_i32_0 = arith.constant 0 : i32
    %c0_i32_1 = arith.constant 0 : i32
    return %c0_i32, %c0_i32_0 : i32, i32
  }
  func.func @transform_7(%arg0: i32) -> (i32, i32) {
    %c0_i32 = arith.constant 0 : i32
    %c0_i32_0 = arith.constant 0 : i32
    %c0_i32_1 = arith.constant 0 : i32
    return %c0_i32, %c0_i32_0 : i32, i32
  }
  func.func @transform_8(%arg0: i32) -> (i32, i32) {
    %c0_i32 = arith.constant 0 : i32
    %c0_i32_0 = arith.constant 0 : i32
    return %arg0, %c0_i32 : i32, i32
  }
}

</mosaic_0001>

<llo_original>
// kernel: tpu_custom_call.1
$region0: #{tpu_custom_call.1}
  #allocation0 [shape = 'u32[]', space=smem, size = 0x4, offset = 0x4, fixed_abs, tag = 'smem constant byte address 0x4 - core index']
  #allocation1 [shape = 'u32[72,128]{1,0:T(1,128)}', space=vmem, size = 0x9000, scoped, tag = 'internal scratch']
  #allocation2 [shape = 'f32[8,1024]{1,0:T(8,128)}', space=vmem, size = 0x8000, scoped, tag = 'scratch operand']
  #allocation3 [shape = 'f32[8,256]{1,0:T(8,128)}', space=vmem, size = 0x2000, scoped, tag = 'scratch operand']
  #allocation4 [shape = 'f32[1,1]{1,0:T(1,128)S(1)}', space=vmem, size = 0x200, scoped, tag = 'scoped memory for tpu_custom_call.1']
  %s0 = inlined_call_operand.hbm [shape: f32[8,32], index: 0, kind: input, shape index: {}]
  %s1 = inlined_call_operand.hbm [shape: f32[32,1024], index: 1, kind: input, shape index: {}]
  %s2 = inlined_call_operand.hbm [shape: f32[32,128], index: 2, kind: input, shape index: {}]
  %s3 = inlined_call_operand.hbm [shape: f32[1,1024], index: 3, kind: input, shape index: {}]
  %s4 = inlined_call_operand.hbm [shape: f32[256,128], index: 4, kind: input, shape index: {}]
  %s5 = inlined_call_operand.vmem [shape: f32[1,128], index: 5, kind: input, shape index: {}]
  %s6 = inlined_call_operand.vmem [shape: f32[1,128], index: 6, kind: input, shape index: {}]
  %s7 = inlined_call_operand.<no memory space> [shape: f32[1,1], index: 7, kind: input, shape index: {}]
  %s8 = inlined_call_operand.vmem [shape: f32[8,1], index: 8, kind: output, shape index: {}]
  %s9 = sld [smem:[#allocation0]]
  $region62: #{tpu_custom_call.1} parent=0
    _
  %s11 = ssub.s32 1, %s9
  %s12 = scalar_select 0, %s11, %s9
  %v13 = vstv %s7
  %14 = vst [vmem:[#allocation4] sm:$0x1] %v13
  $region1: #{tpu_custom_call.1} parent=0
    #allocation5 [shape = 'u8[4096]{0}', space=vmem, size = 0x1000, scoped, tag = 'input window, operand 0, single buffered']
    #allocation6 [shape = 's32[1]{0}', space=sflag, size = 0x4, scoped, tag = 'scoped memory for tpu_custom_call.1']
    #allocation7 [shape = 'u8[131072]{0}', space=vmem, size = 0x20000, scoped, tag = 'input window, operand 1, single buffered']
    #allocation8 [shape = 's32[1]{0}', space=sflag, size = 0x4, scoped, tag = 'scoped memory for tpu_custom_call.1']
    #allocation9 [shape = 'u8[16384]{0}', space=vmem, size = 0x4000, scoped, tag = 'input window, operand 2, single buffered']
    #allocation10 [shape = 'u8[4096]{0}', space=vmem, size = 0x1000, scoped, tag = 'input window, operand 3, single buffered']
    #allocation11 [shape = 's32[1]{0}', space=sflag, size = 0x4, scoped, tag = 'scoped memory for tpu_custom_call.1']
    #allocation12 [shape = 'u8[131072]{0}', space=vmem, size = 0x20000, scoped, tag = 'input window, operand 4, single buffered']
    %15 = vsyncpa [#allocation6], 0
    %16 = vsyncpa [#allocation8], 0
    %17 = vsyncpa [#allocation11], 0
    // Predicated region
    $region2: #{tpu_custom_call.1} parent=1 // pred_check
      _
    $region3: #{tpu_custom_call.1} parent=1 // pred_check_branch
      %19 = sbr.rel (0) target = $region5
    $region4: #{tpu_custom_call.1} parent=1 // pred_region
      %21 = vsyncadd [#allocation6], 0
      %s23 = sshll.u32 %s0, 4
      %s24 = int_to_ptr.hbm [resolvable:$true] %s23
      %s25 = sshll.u32 [#allocation5], 4
      %s26 = int_to_ptr.vmem [resolvable:$true] %s25
      %28 = dma.hbm_to_vmem [thread:$0]  %s24, 128, %s26, [#allocation6]
    $region5: #{tpu_custom_call.1} parent=1 // pred_fallthru
      _
    // Predicated region
    $region6: #{tpu_custom_call.1} parent=1 // pred_check
      _
    $region7: #{tpu_custom_call.1} parent=1 // pred_check_branch
      %30 = sbr.rel (0) target = $region9
    $region8: #{tpu_custom_call.1} parent=1 // pred_region
      %32 = vsyncadd [#allocation8], 0
      %s33 = sshll.u32 %s1, 4
      %s34 = int_to_ptr.hbm [resolvable:$true] %s33
      %s35 = sshll.u32 [#allocation7], 4
      %s36 = int_to_ptr.vmem [resolvable:$true] %s35
      %41 = dma.hbm_to_vmem [thread:$0]  %s34, 4096, %s36, [#allocation8], 1024, 1024, 64
    $region9: #{tpu_custom_call.1} parent=1 // pred_fallthru
      _
    // Predicated region
    $region10: #{tpu_custom_call.1} parent=1 // pred_check
      _
    $region11: #{tpu_custom_call.1} parent=1 // pred_check_branch
      %43 = sbr.rel (0) target = $region13
    $region12: #{tpu_custom_call.1} parent=1 // pred_region
      %45 = vsyncadd [#allocation8], 0
      %s46 = sshll.u32 %s2, 4
      %s47 = int_to_ptr.hbm [resolvable:$true] %s46
      %s48 = sshll.u32 [#allocation9], 4
      %s49 = int_to_ptr.vmem [resolvable:$true] %s48
      %54 = dma.hbm_to_vmem [thread:$0]  %s47, 512, %s49, [#allocation8], 128, 128, 8
    $region13: #{tpu_custom_call.1} parent=1 // pred_fallthru
      _
    // Predicated region
    $region14: #{tpu_custom_call.1} parent=1 // pred_check
      _
    $region15: #{tpu_custom_call.1} parent=1 // pred_check_branch
      %56 = sbr.rel (0) target = $region17
    $region16: #{tpu_custom_call.1} parent=1 // pred_region
      %58 = vsyncadd [#allocation11], 0
      %s60 = sshll.u32 %s3, 4
      %s61 = int_to_ptr.hbm [resolvable:$true] %s60
      %s62 = sshll.u32 [#allocation10], 4
      %s63 = int_to_ptr.vmem [resolvable:$true] %s62
      %65 = dma.hbm_to_vmem [thread:$0]  %s61, 128, %s63, [#allocation11]
    $region17: #{tpu_custom_call.1} parent=1 // pred_fallthru
      _
    // Predicated region
    $region18: #{tpu_custom_call.1} parent=1 // pred_check
      _
    $region19: #{tpu_custom_call.1} parent=1 // pred_check_branch
      %67 = sbr.rel (0) target = $region21
    $region20: #{tpu_custom_call.1} parent=1 // pred_region
      %69 = vsyncadd [#allocation11], 0
      %s70 = sshll.u32 %s4, 4
      %s71 = int_to_ptr.hbm [resolvable:$true] %s70
      %s72 = sshll.u32 [#allocation12], 4
      %s73 = int_to_ptr.vmem [resolvable:$true] %s72
      %78 = dma.hbm_to_vmem [thread:$0]  %s71, 4096, %s73, [#allocation11], 128, 128, 8
    $region21: #{tpu_custom_call.1} parent=1 // pred_fallthru
      _
    // Predicated region
    $region22: #{tpu_custom_call.1} parent=1 // pred_check
      _
    $region23: #{tpu_custom_call.1} parent=1 // pred_check_branch
      %80 = sbr.rel (0) target = $region25
    $region24: #{tpu_custom_call.1} parent=1 // pred_region
      _
    $region25: #{tpu_custom_call.1} parent=1 // pred_fallthru
      _
    // Predicated region
    $region26: #{tpu_custom_call.1} parent=1 // pred_check
      _
    $region27: #{tpu_custom_call.1} parent=1 // pred_check_branch
      %82 = sbr.rel (0) target = $region29
    $region28: #{tpu_custom_call.1} parent=1 // pred_region
      _
    $region29: #{tpu_custom_call.1} parent=1 // pred_fallthru
      _
    // Predicated region
    $region30: #{tpu_custom_call.1} parent=1 // pred_check
      _
    $region31: #{tpu_custom_call.1} parent=1 // pred_check_branch
      %84 = sbr.rel (0) target = $region33
    $region32: #{tpu_custom_call.1} parent=1 // pred_region
      _
    $region33: #{tpu_custom_call.1} parent=1 // pred_fallthru
      _
    // Predicated region
    $region34: #{tpu_custom_call.1} parent=1 // pred_check
      _
    $region35: #{tpu_custom_call.1} parent=1 // pred_check_branch
      %86 = sbr.rel (0) target = $region37
    $region36: #{tpu_custom_call.1} parent=1 // pred_region
      %88 = dma.done [#allocation6], 128
    $region37: #{tpu_custom_call.1} parent=1 // pred_fallthru
      _
    // Predicated region
    $region38: #{tpu_custom_call.1} parent=1 // pred_check
      _
    $region39: #{tpu_custom_call.1} parent=1 // pred_check_branch
      %90 = sbr.rel (0) target = $region41
    $region40: #{tpu_custom_call.1} parent=1 // pred_region
      %92 = dma.done [#allocation8], 4096
    $region41: #{tpu_custom_call.1} parent=1 // pred_fallthru
      _
    // Predicated region
    $region42: #{tpu_custom_call.1} parent=1 // pred_check
      _
    $region43: #{tpu_custom_call.1} parent=1 // pred_check_branch
      %94 = sbr.rel (0) target = $region45
    $region44: #{tpu_custom_call.1} parent=1 // pred_region
      %96 = dma.done [#allocation8], 512
    $region45: #{tpu_custom_call.1} parent=1 // pred_fallthru
      _
    // Predicated region
    $region46: #{tpu_custom_call.1} parent=1 // pred_check
      _
    $region47: #{tpu_custom_call.1} parent=1 // pred_check_branch
      %98 = sbr.rel (0) target = $region49
    $region48: #{tpu_custom_call.1} parent=1 // pred_region
      %100 = dma.done [#allocation11], 128
    $region49: #{tpu_custom_call.1} parent=1 // pred_fallthru
      _
    // Predicated region
    $region50: #{tpu_custom_call.1} parent=1 // pred_check
      _
    $region51: #{tpu_custom_call.1} parent=1 // pred_check_branch
      %102 = sbr.rel (0) target = $region53
    $region52: #{tpu_custom_call.1} parent=1 // pred_region
      %104 = dma.done [#allocation11], 4096
    $region53: #{tpu_custom_call.1} parent=1 // pred_fallthru
      _
    %v105 = vld [vmem:[#allocation5] sm:$0xff]
    %v106 = vld [vmem:[#allocation7] sm:$0xff]
    %v107 = vld [vmem:[#allocation7 + $0x8] sm:$0xff]
    %v108 = vld [vmem:[#allocation7 + $0x10] sm:$0xff]
    %v109 = vld [vmem:[#allocation7 + $0x18] sm:$0xff]
    %v110 = vld [vmem:[#allocation7 + $0x20] sm:$0xff]
    %v111 = vld [vmem:[#allocation7 + $0x28] sm:$0xff]
    %v112 = vld [vmem:[#allocation7 + $0x30] sm:$0xff]
    %v113 = vld [vmem:[#allocation7 + $0x38] sm:$0xff]
    %v114 = vld [vmem:[#allocation7 + $0x40] sm:$0xff]
    %v115 = vld [vmem:[#allocation7 + $0x48] sm:$0xff]
    %v116 = vld [vmem:[#allocation7 + $0x50] sm:$0xff]
    %v117 = vld [vmem:[#allocation7 + $0x58] sm:$0xff]
    %v118 = vld [vmem:[#allocation7 + $0x60] sm:$0xff]
    %v119 = vld [vmem:[#allocation7 + $0x68] sm:$0xff]
    %v120 = vld [vmem:[#allocation7 + $0x70] sm:$0xff]
    %v121 = vld [vmem:[#allocation7 + $0x78] sm:$0xff]
    %v122 = vld [vmem:[#allocation7 + $0x80] sm:$0xff]
    %v123 = vld [vmem:[#allocation7 + $0x88] sm:$0xff]
    %v124 = vld [vmem:[#allocation7 + $0x90] sm:$0xff]
    %v125 = vld [vmem:[#allocation7 + $0x98] sm:$0xff]
    %v126 = vld [vmem:[#allocation7 + $0xa0] sm:$0xff]
    %v127 = vld [vmem:[#allocation7 + $0xa8] sm:$0xff]
    %v128 = vld [vmem:[#allocation7 + $0xb0] sm:$0xff]
    %v129 = vld [vmem:[#allocation7 + $0xb8] sm:$0xff]
    %v130 = vld [vmem:[#allocation7 + $0xc0] sm:$0xff]
    %v131 = vld [vmem:[#allocation7 + $0xc8] sm:$0xff]
    %v132 = vld [vmem:[#allocation7 + $0xd0] sm:$0xff]
    %v133 = vld [vmem:[#allocation7 + $0xd8] sm:$0xff]
    %v134 = vld [vmem:[#allocation7 + $0xe0] sm:$0xff]
    %v135 = vld [vmem:[#allocation7 + $0xe8] sm:$0xff]
    %v136 = vld [vmem:[#allocation7 + $0xf0] sm:$0xff]
    %v137 = vld [vmem:[#allocation7 + $0xf8] sm:$0xff]
    %v138 = vld [vmem:[#allocation10] sm:$0xff]
    %v140 = vperm.slane %v138, 0
    %v141 = vperm.slane %v138, 1
    %v142 = vperm.slane %v138, 2
    %v143 = vperm.slane %v138, 3
    %v144 = vperm.slane %v138, 4
    %v145 = vperm.slane %v138, 5
    %v146 = vperm.slane %v138, 6
    %v147 = vperm.slane %v138, 7
    %vm156 = vcmask 261120
    %v158 = vsel %vm156, %v105, 0
    %160 = vmatpush.msra.mxu0 0.0
    %161 = vmatpush.msra.mxu0 0.0
    %162 = vmatpush.msra.mxu0 0.0
    %163 = vmatpush.msra.mxu0 0.0
    %164 = vmatpush.msra.mxu0 0.0
    %165 = vmatpush.msra.mxu0 0.0
    %166 = vmatpush.msra.mxu0 0.0
    %167 = vmatpush.msra.mxu0 0.0
    %168 = vmatpush.msra.mxu0 0.0
    %169 = vmatpush.msra.mxu0 0.0
    %170 = vmatpush.msra.mxu0 0.0
    %171 = vmatpush.msra.mxu0 0.0
    %172 = vmatpush.msra.mxu0 %v130
    %173 = vmatpush.msra.mxu0 %v122
    %174 = vmatpush.msra.mxu0 %v114
    %175 = vmatpush.msra.mxu0 %v106
    %176 = vmatmul.f32.gmra.mxu0 %v158
    %v177 = vpop.f32.mrf.mxu0
    %v178 = vadd.f32 %v140, %v177
    %179 = vdwg.mxu0
    %180 = vmatpush.msra.mxu0 0.0
    %181 = vmatpush.msra.mxu0 0.0
    %182 = vmatpush.msra.mxu0 0.0
    %183 = vmatpush.msra.mxu0 0.0
    %184 = vmatpush.msra.mxu0 0.0
    %185 = vmatpush.msra.mxu0 0.0
    %186 = vmatpush.msra.mxu0 0.0
    %187 = vmatpush.msra.mxu0 0.0
    %188 = vmatpush.msra.mxu0 0.0
    %189 = vmatpush.msra.mxu0 0.0
    %190 = vmatpush.msra.mxu0 0.0
    %191 = vmatpush.msra.mxu0 0.0
    %192 = vmatpush.msra.mxu0 %v131
    %193 = vmatpush.msra.mxu0 %v123
    %194 = vmatpush.msra.mxu0 %v115
    %195 = vmatpush.msra.mxu0 %v107
    %196 = vmatmul.f32.gmra.mxu0 %v158
    %v197 = vpop.f32.mrf.mxu0
    %v198 = vadd.f32 %v141, %v197
    %199 = vdwg.mxu0
    %200 = vmatpush.msra.mxu0 0.0
    %201 = vmatpush.msra.mxu0 0.0
    %202 = vmatpush.msra.mxu0 0.0
    %203 = vmatpush.msra.mxu0 0.0
    %204 = vmatpush.msra.mxu0 0.0
    %205 = vmatpush.msra.mxu0 0.0
    %206 = vmatpush.msra.mxu0 0.0
    %207 = vmatpush.msra.mxu0 0.0
    %208 = vmatpush.msra.mxu0 0.0
    %209 = vmatpush.msra.mxu0 0.0
    %210 = vmatpush.msra.mxu0 0.0
    %211 = vmatpush.msra.mxu0 0.0
    %212 = vmatpush.msra.mxu0 %v132
    %213 = vmatpush.msra.mxu0 %v124
    %214 = vmatpush.msra.mxu0 %v116
    %215 = vmatpush.msra.mxu0 %v108
    %216 = vmatmul.f32.gmra.mxu0 %v158
    %v217 = vpop.f32.mrf.mxu0
    %v218 = vadd.f32 %v142, %v217
    %219 = vdwg.mxu0
    %220 = vmatpush.msra.mxu0 0.0
    %221 = vmatpush.msra.mxu0 0.0
    %222 = vmatpush.msra.mxu0 0.0
    %223 = vmatpush.msra.mxu0 0.0
    %224 = vmatpush.msra.mxu0 0.0
    %225 = vmatpush.msra.mxu0 0.0
    %226 = vmatpush.msra.mxu0 0.0
    %227 = vmatpush.msra.mxu0 0.0
    %228 = vmatpush.msra.mxu0 0.0
    %229 = vmatpush.msra.mxu0 0.0
    %230 = vmatpush.msra.mxu0 0.0
    %231 = vmatpush.msra.mxu0 0.0
    %232 = vmatpush.msra.mxu0 %v133
    %233 = vmatpush.msra.mxu0 %v125
    %234 = vmatpush.msra.mxu0 %v117
    %235 = vmatpush.msra.mxu0 %v109
    %236 = vmatmul.f32.gmra.mxu0 %v158
    %v237 = vpop.f32.mrf.mxu0
    %v238 = vadd.f32 %v143, %v237
    %239 = vdwg.mxu0
    %240 = vmatpush.msra.mxu0 0.0
    %241 = vmatpush.msra.mxu0 0.0
    %242 = vmatpush.msra.mxu0 0.0
    %243 = vmatpush.msra.mxu0 0.0
    %244 = vmatpush.msra.mxu0 0.0
    %245 = vmatpush.msra.mxu0 0.0
    %246 = vmatpush.msra.mxu0 0.0
    %247 = vmatpush.msra.mxu0 0.0
    %248 = vmatpush.msra.mxu0 0.0
    %249 = vmatpush.msra.mxu0 0.0
    %250 = vmatpush.msra.mxu0 0.0
    %251 = vmatpush.msra.mxu0 0.0
    %252 = vmatpush.msra.mxu0 %v134
    %253 = vmatpush.msra.mxu0 %v126
    %254 = vmatpush.msra.mxu0 %v118
    %255 = vmatpush.msra.mxu0 %v110
    %256 = vmatmul.f32.gmra.mxu0 %v158
    %v257 = vpop.f32.mrf.mxu0
    %v258 = vadd.f32 %v144, %v257
    %259 = vdwg.mxu0
    %260 = vmatpush.msra.mxu0 0.0
    %261 = vmatpush.msra.mxu0 0.0
    %262 = vmatpush.msra.mxu0 0.0
    %263 = vmatpush.msra.mxu0 0.0
    %264 = vmatpush.msra.mxu0 0.0
    %265 = vmatpush.msra.mxu0 0.0
    %266 = vmatpush.msra.mxu0 0.0
    %267 = vmatpush.msra.mxu0 0.0
    %268 = vmatpush.msra.mxu0 0.0
    %269 = vmatpush.msra.mxu0 0.0
    %270 = vmatpush.msra.mxu0 0.0
    %271 = vmatpush.msra.mxu0 0.0
    %272 = vmatpush.msra.mxu0 %v135
    %273 = vmatpush.msra.mxu0 %v127
    %274 = vmatpush.msra.mxu0 %v119
    %275 = vmatpush.msra.mxu0 %v111
    %276 = vmatmul.f32.gmra.mxu0 %v158
    %v277 = vpop.f32.mrf.mxu0
    %v278 = vadd.f32 %v145, %v277
    %279 = vdwg.mxu0
    %280 = vmatpush.msra.mxu0 0.0
    %281 = vmatpush.msra.mxu0 0.0
    %282 = vmatpush.msra.mxu0 0.0
    %283 = vmatpush.msra.mxu0 0.0
    %284 = vmatpush.msra.mxu0 0.0
    %285 = vmatpush.msra.mxu0 0.0
    %286 = vmatpush.msra.mxu0 0.0
    %287 = vmatpush.msra.mxu0 0.0
    %288 = vmatpush.msra.mxu0 0.0
    %289 = vmatpush.msra.mxu0 0.0
    %290 = vmatpush.msra.mxu0 0.0
    %291 = vmatpush.msra.mxu0 0.0
    %292 = vmatpush.msra.mxu0 %v136
    %293 = vmatpush.msra.mxu0 %v128
    %294 = vmatpush.msra.mxu0 %v120
    %295 = vmatpush.msra.mxu0 %v112
    %296 = vmatmul.f32.gmra.mxu0 %v158
    %v297 = vpop.f32.mrf.mxu0
    %v298 = vadd.f32 %v146, %v297
    %299 = vdwg.mxu0
    %300 = vmatpush.msra.mxu0 0.0
    %301 = vmatpush.msra.mxu0 0.0
    %302 = vmatpush.msra.mxu0 0.0
    %303 = vmatpush.msra.mxu0 0.0
    %304 = vmatpush.msra.mxu0 0.0
    %305 = vmatpush.msra.mxu0 0.0
    %306 = vmatpush.msra.mxu0 0.0
    %307 = vmatpush.msra.mxu0 0.0
    %308 = vmatpush.msra.mxu0 0.0
    %309 = vmatpush.msra.mxu0 0.0
    %310 = vmatpush.msra.mxu0 0.0
    %311 = vmatpush.msra.mxu0 0.0
    %312 = vmatpush.msra.mxu0 %v137
    %313 = vmatpush.msra.mxu0 %v129
    %314 = vmatpush.msra.mxu0 %v121
    %315 = vmatpush.msra.mxu0 %v113
    %316 = vmatmul.f32.gmra.mxu0 %v158
    %v317 = vpop.f32.mrf.mxu0
    %v318 = vadd.f32 %v147, %v317
    %319 = vdwg.mxu0
    %320 = vst [vmem:[#allocation2] sm:$0xff] %v178
    %321 = vst [vmem:[#allocation2 + $0x8] sm:$0xff] %v198
    %322 = vst [vmem:[#allocation2 + $0x10] sm:$0xff] %v218
    %323 = vst [vmem:[#allocation2 + $0x18] sm:$0xff] %v238
    %324 = vst [vmem:[#allocation2 + $0x20] sm:$0xff] %v258
    %325 = vst [vmem:[#allocation2 + $0x28] sm:$0xff] %v278
    %326 = vst [vmem:[#allocation2 + $0x30] sm:$0xff] %v298
    %327 = vst [vmem:[#allocation2 + $0x38] sm:$0xff] %v318
    %v328 = vld [vmem:[#allocation9] sm:$0xff]
    %v329 = vld [vmem:[#allocation9 + $0x8] sm:$0xff]
    %v330 = vld [vmem:[#allocation9 + $0x10] sm:$0xff]
    %v331 = vld [vmem:[#allocation9 + $0x18] sm:$0xff]
    %v332 = vld [vmem:[#allocation2] sm:$0xff]
    %v333 = vxor.u32 %v332, 2147483648
    %v334 = vmul.f32 %v333, 1.442695
    %v335 = vpow.pop %v334
    %v336 = vadd.f32 %v335, 1.0
    %v337 = vrcp.pop %v336
    %v338 = vmul.f32 %v336, %v337
    %v339 = vsub.f32 1.0, %v338
    %v340 = vmul.f32 %v337, %v339
    %v341 = vadd.f32 %v337, %v340
    %vm342 = vweird.f32 %v336
    %vm343 = vweird.f32 %v337
    %vm344 = vmor %vm342, %vm343
    %v345 = vsel %vm344, %v337, %v341
    %v346 = vand.u32 2147483647, %v336
    %vm347 = vcmp.eq.f32.partialorder %v346, 8.507059e+37
    %v348 = vand.u32 %v336, 2147483648
    %v349 = vor.u32 1.1754944e-38, %v348
    %v350 = vsel %vm347, %v349, %v345
    %v351 = vmul.f32 1.0, %v350
    %v352 = vtanh.pop %v332
    %354 = vrot.lane.b32.xlu0 %v352, 64
    %v355 = vpop.permute.xlu0 %354
    %v357 = vmul.f32 %v351, %v355
    %v358 = vtanh.pop %v357
    %360 = vrot.lane.b32.xlu0 %v358, 96
    %v361 = vpop.permute.xlu0 %360
    %v363 = vmul.f32 %v351, %v361
    %365 = vrot.lane.b32.xlu0 %v363, 32
    %v366 = vpop.permute.xlu0 %365
    %368 = vst.msk [vmem:[#allocation3] sm:$0xff] %vm156, %v366
    %v369 = vld [vmem:[#allocation2 + $0x8] sm:$0xff]
    %v370 = vsel %vm156, %v366, 0
    %372 = vmatpush.msra.mxu0 0.0
    %373 = vmatpush.msra.mxu0 0.0
    %374 = vmatpush.msra.mxu0 0.0
    %375 = vmatpush.msra.mxu0 0.0
    %376 = vmatpush.msra.mxu0 0.0
    %377 = vmatpush.msra.mxu0 0.0
    %378 = vmatpush.msra.mxu0 0.0
    %379 = vmatpush.msra.mxu0 0.0
    %380 = vmatpush.msra.mxu0 0.0
    %381 = vmatpush.msra.mxu0 0.0
    %382 = vmatpush.msra.mxu0 0.0
    %383 = vmatpush.msra.mxu0 0.0
    %384 = vmatpush.msra.mxu0 %v331
    %385 = vmatpush.msra.mxu0 %v330
    %386 = vmatpush.msra.mxu0 %v329
    %387 = vmatpush.msra.mxu0 %v328
    %388 = vmatmul.f32.gmra.mxu0 %v370
    %v389 = vpop.f32.mrf.mxu0
    %v390 = vadd.f32 0.0, %v389
    %391 = vdwg.mxu0
    %v392 = vadd.f32 %v369, %v390
    %v393 = vxor.u32 %v392, 2147483648
    %v394 = vmul.f32 %v393, 1.442695
    %v395 = vpow.pop %v394
    %v396 = vadd.f32 %v395, 1.0
    %v397 = vrcp.pop %v396
    %v398 = vmul.f32 %v396, %v397
    %v399 = vsub.f32 1.0, %v398
    %v400 = vmul.f32 %v397, %v399
    %v401 = vadd.f32 %v397, %v400
    %vm402 = vweird.f32 %v396
    %vm403 = vweird.f32 %v397
    %vm404 = vmor %vm402, %vm403
    %v405 = vsel %vm404, %v397, %v401
    %v406 = vand.u32 2147483647, %v396
    %vm407 = vcmp.eq.f32.partialorder %v406, 8.507059e+37
    %v408 = vand.u32 %v396, 2147483648
    %v409 = vor.u32 1.1754944e-38, %v408
    %v410 = vsel %vm407, %v409, %v405
    %v411 = vmul.f32 1.0, %v410
    %v412 = vtanh.pop %v392
    %414 = vrot.lane.b32.xlu0 %v357, 32
    %v415 = vpop.permute.xlu0 %414
    %v417 = vmul.f32 %v411, %v415
    %419 = vrot.lane.b32.xlu0 %v412, 64
    %v420 = vpop.permute.xlu0 %419
    %v422 = vmul.f32 %v411, %v420
    %424 = vrot.lane.b32.xlu0 %v422, 32
    %v425 = vpop.permute.xlu0 %424
    %v427 = vadd.f32 %v417, %v425
    %v428 = vtanh.pop %v427
    %430 = vrot.lane.b32.xlu0 %v428, 64
    %v431 = vpop.permute.xlu0 %430
    %v433 = vmul.f32 %v411, %v431
    %435 = vrot.lane.b32.xlu0 %v433, 64
    %v436 = vpop.permute.xlu0 %435
    %vm438 = vcmask 523520
    %439 = vst.msk [vmem:[#allocation3] sm:$0xff] %vm438, %v436
    %v440 = vld [vmem:[#allocation2 + $0x10] sm:$0xff]
    %441 = vrot.lane.b32.xlu0 %v433, 32
    %v442 = vpop.permute.xlu0 %441
    %v443 = vsel %vm156, %v442, 0
    %445 = vmatpush.msra.mxu0 0.0
    %446 = vmatpush.msra.mxu0 0.0
    %447 = vmatpush.msra.mxu0 0.0
    %448 = vmatpush.msra.mxu0 0.0
    %449 = vmatpush.msra.mxu0 0.0
    %450 = vmatpush.msra.mxu0 0.0
    %451 = vmatpush.msra.mxu0 0.0
    %452 = vmatpush.msra.mxu0 0.0
    %453 = vmatpush.msra.mxu0 0.0
    %454 = vmatpush.msra.mxu0 0.0
    %455 = vmatpush.msra.mxu0 0.0
    %456 = vmatpush.msra.mxu0 0.0
    %457 = vmatpush.msra.mxu0 %v331
    %458 = vmatpush.msra.mxu0 %v330
    %459 = vmatpush.msra.mxu0 %v329
    %460 = vmatpush.msra.mxu0 %v328
    %461 = vmatmul.f32.gmra.mxu0 %v443
    %v462 = vpop.f32.mrf.mxu0
    %v463 = vadd.f32 0.0, %v462
    %464 = vdwg.mxu0
    %v465 = vadd.f32 %v440, %v463
    %v466 = vxor.u32 %v465, 2147483648
    %v467 = vmul.f32 %v466, 1.442695
    %v468 = vpow.pop %v467
    %v469 = vadd.f32 %v468, 1.0
    %v470 = vrcp.pop %v469
    %v471 = vmul.f32 %v469, %v470
    %v472 = vsub.f32 1.0, %v471
    %v473 = vmul.f32 %v470, %v472
    %v474 = vadd.f32 %v470, %v473
    %vm475 = vweird.f32 %v469
    %vm476 = vweird.f32 %v470
    %vm477 = vmor %vm475, %vm476
    %v478 = vsel %vm477, %v470, %v474
    %v479 = vand.u32 2147483647, %v469
    %vm480 = vcmp.eq.f32.partialorder %v479, 8.507059e+37
    %v481 = vand.u32 %v469, 2147483648
    %v482 = vor.u32 1.1754944e-38, %v481
    %v483 = vsel %vm480, %v482, %v478
    %v484 = vmul.f32 1.0, %v483
    %v485 = vtanh.pop %v465
    %v486 = vmul.f32 %v484, %v427
    %488 = vrot.lane.b32.xlu0 %v485, 64
    %v489 = vpop.permute.xlu0 %488
    %v491 = vmul.f32 %v484, %v489
    %493 = vrot.lane.b32.xlu0 %v491, 32
    %v494 = vpop.permute.xlu0 %493
    %v496 = vadd.f32 %v486, %v494
    %v497 = vtanh.pop %v496
    %499 = vrot.lane.b32.xlu0 %v497, 64
    %v500 = vpop.permute.xlu0 %499
    %v502 = vmul.f32 %v484, %v500
    %504 = vrot.lane.b32.xlu0 %v502, 96
    %v505 = vpop.permute.xlu0 %504
    %vm507 = vcmask 785920
    %508 = vst.msk [vmem:[#allocation3] sm:$0xff] %vm507, %v505
    %v509 = vld [vmem:[#allocation2 + $0x18] sm:$0xff]
    %510 = vrot.lane.b32.xlu0 %v502, 32
    %v511 = vpop.permute.xlu0 %510
    %v512 = vsel %vm156, %v511, 0
    %514 = vmatpush.msra.mxu0 0.0
    %515 = vmatpush.msra.mxu0 0.0
    %516 = vmatpush.msra.mxu0 0.0
    %517 = vmatpush.msra.mxu0 0.0
    %518 = vmatpush.msra.mxu0 0.0
    %519 = vmatpush.msra.mxu0 0.0
    %520 = vmatpush.msra.mxu0 0.0
    %521 = vmatpush.msra.mxu0 0.0
    %522 = vmatpush.msra.mxu0 0.0
    %523 = vmatpush.msra.mxu0 0.0
    %524 = vmatpush.msra.mxu0 0.0
    %525 = vmatpush.msra.mxu0 0.0
    %526 = vmatpush.msra.mxu0 %v331
    %527 = vmatpush.msra.mxu0 %v330
    %528 = vmatpush.msra.mxu0 %v329
    %529 = vmatpush.msra.mxu0 %v328
    %530 = vmatmul.f32.gmra.mxu0 %v512
    %v531 = vpop.f32.mrf.mxu0
    %v532 = vadd.f32 0.0, %v531
    %533 = vdwg.mxu0
    %v534 = vadd.f32 %v509, %v532
    %v535 = vxor.u32 %v534, 2147483648
    %v536 = vmul.f32 %v535, 1.442695
    %v537 = vpow.pop %v536
    %v538 = vadd.f32 %v537, 1.0
    %v539 = vrcp.pop %v538
    %v540 = vmul.f32 %v538, %v539
    %v541 = vsub.f32 1.0, %v540
    %v542 = vmul.f32 %v539, %v541
    %v543 = vadd.f32 %v539, %v542
    %vm544 = vweird.f32 %v538
    %vm545 = vweird.f32 %v539
    %vm546 = vmor %vm544, %vm545
    %v547 = vsel %vm546, %v539, %v543
    %v548 = vand.u32 2147483647, %v538
    %vm549 = vcmp.eq.f32.partialorder %v548, 8.507059e+37
    %v550 = vand.u32 %v538, 2147483648
    %v551 = vor.u32 1.1754944e-38, %v550
    %v552 = vsel %vm549, %v551, %v547
    %v553 = vmul.f32 1.0, %v552
    %v554 = vtanh.pop %v534
    %v555 = vmul.f32 %v553, %v496
    %557 = vrot.lane.b32.xlu0 %v554, 64
    %v558 = vpop.permute.xlu0 %557
    %v560 = vmul.f32 %v553, %v558
    %562 = vrot.lane.b32.xlu0 %v560, 32
    %v563 = vpop.permute.xlu0 %562
    %v565 = vadd.f32 %v555, %v563
    %v566 = vtanh.pop %v565
    %568 = vrot.lane.b32.xlu0 %v566, 64
    %v569 = vpop.permute.xlu0 %568
    %v571 = vmul.f32 %v553, %v569
    %vm572 = vcmask 1048320
    %573 = vst.msk [vmem:[#allocation3] sm:$0xff] %vm572, %v571
    %v574 = vld [vmem:[#allocation2 + $0x20] sm:$0xff]
    %576 = vrot.lane.b32.xlu0 %v571, 32
    %v577 = vpop.permute.xlu0 %576
    %v578 = vsel %vm156, %v577, 0
    %580 = vmatpush.msra.mxu0 0.0
    %581 = vmatpush.msra.mxu0 0.0
    %582 = vmatpush.msra.mxu0 0.0
    %583 = vmatpush.msra.mxu0 0.0
    %584 = vmatpush.msra.mxu0 0.0
    %585 = vmatpush.msra.mxu0 0.0
    %586 = vmatpush.msra.mxu0 0.0
    %587 = vmatpush.msra.mxu0 0.0
    %588 = vmatpush.msra.mxu0 0.0
    %589 = vmatpush.msra.mxu0 0.0
    %590 = vmatpush.msra.mxu0 0.0
    %591 = vmatpush.msra.mxu0 0.0
    %592 = vmatpush.msra.mxu0 %v331
    %593 = vmatpush.msra.mxu0 %v330
    %594 = vmatpush.msra.mxu0 %v329
    %595 = vmatpush.msra.mxu0 %v328
    %596 = vmatmul.f32.gmra.mxu0 %v578
    %v597 = vpop.f32.mrf.mxu0
    %v598 = vadd.f32 0.0, %v597
    %599 = vdwg.mxu0
    %v600 = vadd.f32 %v574, %v598
    %v601 = vxor.u32 %v600, 2147483648
    %v602 = vmul.f32 %v601, 1.442695
    %v603 = vpow.pop %v602
    %v604 = vadd.f32 %v603, 1.0
    %v605 = vrcp.pop %v604
    %v606 = vmul.f32 %v604, %v605
    %v607 = vsub.f32 1.0, %v606
    %v608 = vmul.f32 %v605, %v607
    %v609 = vadd.f32 %v605, %v608
    %vm610 = vweird.f32 %v604
    %vm611 = vweird.f32 %v605
    %vm612 = vmor %vm610, %vm611
    %v613 = vsel %vm612, %v605, %v609
    %v614 = vand.u32 2147483647, %v604
    %vm615 = vcmp.eq.f32.partialorder %v614, 8.507059e+37
    %v616 = vand.u32 %v604, 2147483648
    %v617 = vor.u32 1.1754944e-38, %v616
    %v618 = vsel %vm615, %v617, %v613
    %v619 = vmul.f32 1.0, %v618
    %v620 = vtanh.pop %v600
    %v621 = vmul.f32 %v619, %v565
    %623 = vrot.lane.b32.xlu0 %v620, 64
    %v624 = vpop.permute.xlu0 %623
    %v626 = vmul.f32 %v619, %v624
    %628 = vrot.lane.b32.xlu0 %v626, 32
    %v629 = vpop.permute.xlu0 %628
    %v631 = vadd.f32 %v621, %v629
    %v632 = vtanh.pop %v631
    %634 = vrot.lane.b32.xlu0 %v632, 64
    %v635 = vpop.permute.xlu0 %634
    %v637 = vmul.f32 %v619, %v635
    %639 = vrot.lane.b32.xlu0 %v637, 32
    %v640 = vpop.permute.xlu0 %639
    %642 = vst.msk [vmem:[#allocation3 + $0x8] sm:$0xff] %vm156, %v640
    %v643 = vld [vmem:[#allocation2 + $0x28] sm:$0xff]
    %v644 = vsel %vm156, %v640, 0
    %646 = vmatpush.msra.mxu0 0.0
    %647 = vmatpush.msra.mxu0 0.0
    %648 = vmatpush.msra.mxu0 0.0
    %649 = vmatpush.msra.mxu0 0.0
    %650 = vmatpush.msra.mxu0 0.0
    %651 = vmatpush.msra.mxu0 0.0
    %652 = vmatpush.msra.mxu0 0.0
    %653 = vmatpush.msra.mxu0 0.0
    %654 = vmatpush.msra.mxu0 0.0
    %655 = vmatpush.msra.mxu0 0.0
    %656 = vmatpush.msra.mxu0 0.0
    %657 = vmatpush.msra.mxu0 0.0
    %658 = vmatpush.msra.mxu0 %v331
    %659 = vmatpush.msra.mxu0 %v330
    %660 = vmatpush.msra.mxu0 %v329
    %661 = vmatpush.msra.mxu0 %v328
    %662 = vmatmul.f32.gmra.mxu0 %v644
    %v663 = vpop.f32.mrf.mxu0
    %v664 = vadd.f32 0.0, %v663
    %665 = vdwg.mxu0
    %v666 = vadd.f32 %v643, %v664
    %v667 = vxor.u32 %v666, 2147483648
    %v668 = vmul.f32 %v667, 1.442695
    %v669 = vpow.pop %v668
    %v670 = vadd.f32 %v669, 1.0
    %v671 = vrcp.pop %v670
    %v672 = vmul.f32 %v670, %v671
    %v673 = vsub.f32 1.0, %v672
    %v674 = vmul.f32 %v671, %v673
    %v675 = vadd.f32 %v671, %v674
    %vm676 = vweird.f32 %v670
    %vm677 = vweird.f32 %v671
    %vm678 = vmor %vm676, %vm677
    %v679 = vsel %vm678, %v671, %v675
    %v680 = vand.u32 2147483647, %v670
    %vm681 = vcmp.eq.f32.partialorder %v680, 8.507059e+37
    %v682 = vand.u32 %v670, 2147483648
    %v683 = vor.u32 1.1754944e-38, %v682
    %v684 = vsel %vm681, %v683, %v679
    %v685 = vmul.f32 1.0, %v684
    %v686 = vtanh.pop %v666
    %v687 = vmul.f32 %v685, %v631
    %689 = vrot.lane.b32.xlu0 %v686, 64
    %v690 = vpop.permute.xlu0 %689
    %v692 = vmul.f32 %v685, %v690
    %694 = vrot.lane.b32.xlu0 %v692, 32
    %v695 = vpop.permute.xlu0 %694
    %v697 = vadd.f32 %v687, %v695
    %v698 = vtanh.pop %v697
    %700 = vrot.lane.b32.xlu0 %v698, 64
    %v701 = vpop.permute.xlu0 %700
    %v703 = vmul.f32 %v685, %v701
    %705 = vrot.lane.b32.xlu0 %v703, 64
    %v706 = vpop.permute.xlu0 %705
    %708 = vst.msk [vmem:[#allocation3 + $0x8] sm:$0xff] %vm438, %v706
    %v709 = vld [vmem:[#allocation2 + $0x30] sm:$0xff]
    %710 = vrot.lane.b32.xlu0 %v703, 32
    %v711 = vpop.permute.xlu0 %710
    %v712 = vsel %vm156, %v711, 0
    %714 = vmatpush.msra.mxu0 0.0
    %715 = vmatpush.msra.mxu0 0.0
    %716 = vmatpush.msra.mxu0 0.0
    %717 = vmatpush.msra.mxu0 0.0
    %718 = vmatpush.msra.mxu0 0.0
    %719 = vmatpush.msra.mxu0 0.0
    %720 = vmatpush.msra.mxu0 0.0
    %721 = vmatpush.msra.mxu0 0.0
    %722 = vmatpush.msra.mxu0 0.0
    %723 = vmatpush.msra.mxu0 0.0
    %724 = vmatpush.msra.mxu0 0.0
    %725 = vmatpush.msra.mxu0 0.0
    %726 = vmatpush.msra.mxu0 %v331
    %727 = vmatpush.msra.mxu0 %v330
    %728 = vmatpush.msra.mxu0 %v329
    %729 = vmatpush.msra.mxu0 %v328
    %730 = vmatmul.f32.gmra.mxu0 %v712
    %v731 = vpop.f32.mrf.mxu0
    %v732 = vadd.f32 0.0, %v731
    %733 = vdwg.mxu0
    %v734 = vadd.f32 %v709, %v732
    %v735 = vxor.u32 %v734, 2147483648
    %v736 = vmul.f32 %v735, 1.442695
    %v737 = vpow.pop %v736
    %v738 = vadd.f32 %v737, 1.0
    %v739 = vrcp.pop %v738
    %v740 = vmul.f32 %v738, %v739
    %v741 = vsub.f32 1.0, %v740
    %v742 = vmul.f32 %v739, %v741
    %v743 = vadd.f32 %v739, %v742
    %vm744 = vweird.f32 %v738
    %vm745 = vweird.f32 %v739
    %vm746 = vmor %vm744, %vm745
    %v747 = vsel %vm746, %v739, %v743
    %v748 = vand.u32 2147483647, %v738
    %vm749 = vcmp.eq.f32.partialorder %v748, 8.507059e+37
    %v750 = vand.u32 %v738, 2147483648
    %v751 = vor.u32 1.1754944e-38, %v750
    %v752 = vsel %vm749, %v751, %v747
    %v753 = vmul.f32 1.0, %v752
    %v754 = vtanh.pop %v734
    %v755 = vmul.f32 %v753, %v697
    %757 = vrot.lane.b32.xlu0 %v754, 64
    %v758 = vpop.permute.xlu0 %757
    %v760 = vmul.f32 %v753, %v758
    %762 = vrot.lane.b32.xlu0 %v760, 32
    %v763 = vpop.permute.xlu0 %762
    %v765 = vadd.f32 %v755, %v763
    %v766 = vtanh.pop %v765
    %768 = vrot.lane.b32.xlu0 %v766, 64
    %v769 = vpop.permute.xlu0 %768
    %v771 = vmul.f32 %v753, %v769
    %773 = vrot.lane.b32.xlu0 %v771, 96
    %v774 = vpop.permute.xlu0 %773
    %776 = vst.msk [vmem:[#allocation3 + $0x8] sm:$0xff] %vm507, %v774
    %v777 = vld [vmem:[#allocation2 + $0x38] sm:$0xff]
    %778 = vrot.lane.b32.xlu0 %v771, 32
    %v779 = vpop.permute.xlu0 %778
    %v780 = vsel %vm156, %v779, 0
    %782 = vmatpush.msra.mxu0 0.0
    %783 = vmatpush.msra.mxu0 0.0
    %784 = vmatpush.msra.mxu0 0.0
    %785 = vmatpush.msra.mxu0 0.0
    %786 = vmatpush.msra.mxu0 0.0
    %787 = vmatpush.msra.mxu0 0.0
    %788 = vmatpush.msra.mxu0 0.0
    %789 = vmatpush.msra.mxu0 0.0
    %790 = vmatpush.msra.mxu0 0.0
    %791 = vmatpush.msra.mxu0 0.0
    %792 = vmatpush.msra.mxu0 0.0
    %793 = vmatpush.msra.mxu0 0.0
    %794 = vmatpush.msra.mxu0 %v331
    %795 = vmatpush.msra.mxu0 %v330
    %796 = vmatpush.msra.mxu0 %v329
    %797 = vmatpush.msra.mxu0 %v328
    %798 = vmatmul.f32.gmra.mxu0 %v780
    %v799 = vpop.f32.mrf.mxu0
    %v800 = vadd.f32 0.0, %v799
    %801 = vdwg.mxu0
    %v802 = vadd.f32 %v777, %v800
    %v803 = vxor.u32 %v802, 2147483648
    %v804 = vmul.f32 %v803, 1.442695
    %v805 = vpow.pop %v804
    %v806 = vadd.f32 %v805, 1.0
    %v807 = vrcp.pop %v806
    %v808 = vmul.f32 %v806, %v807
    %v809 = vsub.f32 1.0, %v808
    %v810 = vmul.f32 %v807, %v809
    %v811 = vadd.f32 %v807, %v810
    %vm812 = vweird.f32 %v806
    %vm813 = vweird.f32 %v807
    %vm814 = vmor %vm812, %vm813
    %v815 = vsel %vm814, %v807, %v811
    %v816 = vand.u32 2147483647, %v806
    %vm817 = vcmp.eq.f32.partialorder %v816, 8.507059e+37
    %v818 = vand.u32 %v806, 2147483648
    %v819 = vor.u32 1.1754944e-38, %v818
    %v820 = vsel %vm817, %v819, %v815
    %v821 = vmul.f32 1.0, %v820
    %v822 = vtanh.pop %v802
    %v823 = vmul.f32 %v821, %v765
    %825 = vrot.lane.b32.xlu0 %v822, 64
    %v826 = vpop.permute.xlu0 %825
    %v828 = vmul.f32 %v821, %v826
    %830 = vrot.lane.b32.xlu0 %v828, 32
    %v831 = vpop.permute.xlu0 %830
    %v833 = vadd.f32 %v823, %v831
    %v834 = vtanh.pop %v833
    %836 = vrot.lane.b32.xlu0 %v834, 64
    %v837 = vpop.permute.xlu0 %836
    %v839 = vmul.f32 %v821, %v837
    %840 = vst.msk [vmem:[#allocation3 + $0x8] sm:$0xff] %vm572, %v839
    %v841 = vld [vmem:[#allocation3] sm:$0xff]
    %v842 = vld [vmem:[#allocation3 + $0x8] sm:$0xff]
    %v843 = vld [vmem:[#allocation12] sm:$0xff]
    %v844 = vld [vmem:[#allocation12 + $0x8] sm:$0xff]
    %v845 = vld [vmem:[#allocation12 + $0x10] sm:$0xff]
    %v846 = vld [vmem:[#allocation12 + $0x18] sm:$0xff]
    %v847 = vld [vmem:[#allocation12 + $0x20] sm:$0xff]
    %v848 = vld [vmem:[#allocation12 + $0x28] sm:$0xff]
    %v849 = vld [vmem:[#allocation12 + $0x30] sm:$0xff]
    %v850 = vld [vmem:[#allocation12 + $0x38] sm:$0xff]
    %v851 = vld [vmem:[#allocation12 + $0x40] sm:$0xff]
    %v852 = vld [vmem:[#allocation12 + $0x48] sm:$0xff]
    %v853 = vld [vmem:[#allocation12 + $0x50] sm:$0xff]
    %v854 = vld [vmem:[#allocation12 + $0x58] sm:$0xff]
    %v855 = vld [vmem:[#allocation12 + $0x60] sm:$0xff]
    %v856 = vld [vmem:[#allocation12 + $0x68] sm:$0xff]
    %v857 = vld [vmem:[#allocation12 + $0x70] sm:$0xff]
    %v858 = vld [vmem:[#allocation12 + $0x78] sm:$0xff]
    %v859 = vld [vmem:[#allocation12 + $0x80] sm:$0xff]
    %v860 = vld [vmem:[#allocation12 + $0x88] sm:$0xff]
    %v861 = vld [vmem:[#allocation12 + $0x90] sm:$0xff]
    %v862 = vld [vmem:[#allocation12 + $0x98] sm:$0xff]
    %v863 = vld [vmem:[#allocation12 + $0xa0] sm:$0xff]
    %v864 = vld [vmem:[#allocation12 + $0xa8] sm:$0xff]
    %v865 = vld [vmem:[#allocation12 + $0xb0] sm:$0xff]
    %v866 = vld [vmem:[#allocation12 + $0xb8] sm:$0xff]
    %v867 = vld [vmem:[#allocation12 + $0xc0] sm:$0xff]
    %v868 = vld [vmem:[#allocation12 + $0xc8] sm:$0xff]
    %v869 = vld [vmem:[#allocation12 + $0xd0] sm:$0xff]
    %v870 = vld [vmem:[#allocation12 + $0xd8] sm:$0xff]
    %v871 = vld [vmem:[#allocation12 + $0xe0] sm:$0xff]
    %v872 = vld [vmem:[#allocation12 + $0xe8] sm:$0xff]
    %v873 = vld [vmem:[#allocation12 + $0xf0] sm:$0xff]
    %v874 = vld [vmem:[#allocation12 + $0xf8] sm:$0xff]
    %v875 = vld [vmem:[%s5] sm:$0x1]
    %v877 = vperm.slane %v875, 0
    %879 = vmatpush.msra.mxu0 %v858
    %880 = vmatpush.msra.mxu0 %v857
    %881 = vmatpush.msra.mxu0 %v856
    %882 = vmatpush.msra.mxu0 %v855
    %883 = vmatpush.msra.mxu0 %v854
    %884 = vmatpush.msra.mxu0 %v853
    %885 = vmatpush.msra.mxu0 %v852
    %886 = vmatpush.msra.mxu0 %v851
    %887 = vmatpush.msra.mxu0 %v850
    %888 = vmatpush.msra.mxu0 %v849
    %889 = vmatpush.msra.mxu0 %v848
    %890 = vmatpush.msra.mxu0 %v847
    %891 = vmatpush.msra.mxu0 %v846
    %892 = vmatpush.msra.mxu0 %v845
    %893 = vmatpush.msra.mxu0 %v844
    %894 = vmatpush.msra.mxu0 %v843
    %895 = vmatmul.f32.gmra.mxu0 %v841
    %v896 = vpop.f32.mrf.mxu0
    %v897 = vadd.f32 %v877, %v896
    %898 = vdwg.mxu0
    %899 = vmatpush.msra.mxu0 %v874
    %900 = vmatpush.msra.mxu0 %v873
    %901 = vmatpush.msra.mxu0 %v872
    %902 = vmatpush.msra.mxu0 %v871
    %903 = vmatpush.msra.mxu0 %v870
    %904 = vmatpush.msra.mxu0 %v869
    %905 = vmatpush.msra.mxu0 %v868
    %906 = vmatpush.msra.mxu0 %v867
    %907 = vmatpush.msra.mxu0 %v866
    %908 = vmatpush.msra.mxu0 %v865
    %909 = vmatpush.msra.mxu0 %v864
    %910 = vmatpush.msra.mxu0 %v863
    %911 = vmatpush.msra.mxu0 %v862
    %912 = vmatpush.msra.mxu0 %v861
    %913 = vmatpush.msra.mxu0 %v860
    %914 = vmatpush.msra.mxu0 %v859
    %915 = vmatmul.f32.gmra.mxu0 %v842
    %v916 = vpop.f32.mrf.mxu0
    %v917 = vadd.f32 %v897, %v916
    %918 = vdwg.mxu0
    %v919 = vmax.f32 %v917, 0.0
    %v920 = vld [vmem:[%s6] sm:$0x1]
    %v922 = vperm.slane %v920, 0
    %v924 = vmul.f32 %v919, %v922
    %925 = vadd.xlane.f32.xlu0 %v924
    %v926 = vpop.xlane.xlu0 %925
    %v927 = vld [vmem:[#allocation4] sm:$0x1]
    %v929 = vperm.slane %v927, 0
    %v931 = vadd.f32 %v926, %v929
    %vm932 = vcmask 7168
    %933 = vst.msk [vmem:[%s8] sm:$0xff] %vm932, %v931
    // Predicated region
    $region54: #{tpu_custom_call.1} parent=1 // pred_check
      _
    $region55: #{tpu_custom_call.1} parent=1 // pred_check_branch
      %935 = sbr.rel (0) target = $region57
    $region56: #{tpu_custom_call.1} parent=1 // pred_region
      _
    $region57: #{tpu_custom_call.1} parent=1 // pred_fallthru
      _
    // Predicated region
    $region58: #{tpu_custom_call.1} parent=1 // pred_check
      _
    $region59: #{tpu_custom_call.1} parent=1 // pred_check_branch
      %937 = sbr.rel (0) target = $region61
    $region60: #{tpu_custom_call.1} parent=1 // pred_region
      _
    $region61: #{tpu_custom_call.1} parent=1 // pred_fallthru
      _
    %938 = vsyncpa [#allocation6], 1
    %939 = vsyncpa [#allocation8], 1
    %940 = vsyncpa [#allocation11], 1

</llo_original>
